<compile_context>
chip_gen: v7x
topology: tpu7x:2x2x1
jax: 0.10.0
libtpu: 0.0.40
codegen_flags: <defaults>
</compile_context>

<pallas_src>
import jax
import jax.numpy as jnp
import numpy as np
from jax.experimental import pallas as pl
from jax.experimental.pallas import tpu as pltpu

EPS = 1e-5          # BatchNorm eps (PyTorch default)
C_IN = 3            # conv in-channels
C_PAD = 8           # in-channels padded to 8 sublanes per input
C_OUT = 8           # conv out-channels
N_CONV = 6          # conv1..conv6 in the original module
M = 3 * C_OUT       # rows of the folded weight: [v1 | v2 | v10] blocks


def model_kernel(x_ref, p_ref, out_ref):
    # x_ref  : (16, P)  rows 0:3 = gathered x1 channels, rows 8:11 = x2, rest 0
    # p_ref  : (48, 16) rows 0:24 = folded conv weight W,
    #                   rows 24:48: col 0 = gamma, col 1 = beta (per-row affine)
    # out_ref: (8, P)
    x = x_ref[...]                                    # (16, P)
    w = p_ref[0:M, :]                                 # (24, 16)
    g = p_ref[M:2 * M, 0:1]                           # (24, 1)
    be = p_ref[M:2 * M, 1:2]                          # (24, 1)

    # One MXU matmul = all six 1x1 convs folded to three row-blocks:
    #   y[0:8]   = conv1(x1)                              (bias dropped)
    #   y[8:16]  = conv2(x2)                              (bias dropped)
    #   y[16:24] = conv3(x1)+conv4(x1)+conv5(x2)-conv6(x2) (biases dropped)
    # Dropping biases is exact: training-mode BatchNorm is shift-invariant.
    y = jnp.dot(w, x, preferred_element_type=jnp.float32)    # (24, P)

    # Training-mode BN statistics over the flattened N*H*W axis, computed once
    # for the whole stacked slab, single pass: two independent lane reductions.
    inv_p = 1.0 / y.shape[1]
    s1 = jnp.sum(y, axis=1, keepdims=True)                    # (24, 1)
    s2 = jnp.sum(y * y, axis=1, keepdims=True)                # (24, 1)
    mean = s1 * inv_p
    var = s2 * inv_p - mean * mean                            # biased variance
    scale = jax.lax.rsqrt(var + EPS) * g                      # (24, 1)
    z = (y - mean) * scale + be                               # (24, P)

    v5 = z[0:C_OUT, :] + z[C_OUT:2 * C_OUT, :]                # bn1(v1)+bn2(v2)
    v15 = z[2 * C_OUT:3 * C_OUT, :]                           # bn3-bn4+bn5+bn6 of v10
    out_ref[...] = v5 * pl.reciprocal(v15, approx=False)


@jax.jit
def model_forward(x1, x2, params):
    n, c, h, w = x1.shape
    assert n == 1 and c == C_IN, "kernel packing assumes N=1, C_in=3"
    assert h % 2 == 0 and w % 2 == 0, "strided gather assumes even H, W"
    h_out = (h + 2 - 1) // 2 + 1
    w_out = (w + 2 - 1) // 2 + 1
    p = h_out * w_out

    # 1x1 conv, stride=2, padding=1: output (i, j) reads input (2i-1, 2j-1),
    # zero contribution when i==0 or j==0.  Build the channel-major slab.
    # (This zero-init + two strided scatters fuses into one small XLA fusion.)
    xg = jnp.zeros((2 * C_PAD, h_out, w_out), x1.dtype)
    xg = xg.at[0:C_IN, 1:, 1:].set(x1[0, :, 1::2, 1::2])
    xg = xg.at[C_PAD:C_PAD + C_IN, 1:, 1:].set(x2[0, :, 1::2, 1::2])
    xg = xg.reshape(2 * C_PAD, p)

    out_flat = pl.pallas_call(
        model_kernel,
        out_shape=jax.ShapeDtypeStruct((C_OUT, p), jnp.float32),
        in_specs=[pl.BlockSpec(memory_space=pltpu.MemorySpace.VMEM)] * 2,
        out_specs=pl.BlockSpec(memory_space=pltpu.MemorySpace.VMEM),
    )(xg, params)

    # (8, P) is already channel-major NCHW for N=1: plain reshape, no transpose.
    return out_flat.reshape(1, C_OUT, h_out, w_out)


# ---------------- pure-JAX reference (for correctness check) ----------------
def reference(x1, x2, ws, bs, gs, bts):
    def conv(x, w, b):
        k = w.reshape(C_OUT, C_IN, 1, 1)                       # OIHW
        y = jax.lax.conv_general_dilated(
            x, k, window_strides=(2, 2), padding=((1, 1), (1, 1)),
            dimension_numbers=("NCHW", "OIHW", "NCHW"),
            precision=jax.lax.Precision.HIGHEST)
        return y + b.reshape(1, C_OUT, 1, 1)

    def bn(v, g, bt):
        m = v.mean(axis=(0, 2, 3), keepdims=True)
        var = ((v - m) ** 2).mean(axis=(0, 2, 3), keepdims=True)
        return (v - m) / jnp.sqrt(var + EPS) * g.reshape(1, C_OUT, 1, 1) \
            + bt.reshape(1, C_OUT, 1, 1)

    v1 = conv(x1, ws[0], bs[0]); v2 = conv(x2, ws[1], bs[1])
    v5 = bn(v1, gs[0], bts[0]) + bn(v2, gs[1], bts[1])
    v6 = conv(x1, ws[2], bs[2]); v7 = conv(x1, ws[3], bs[3])
    v8 = conv(x2, ws[4], bs[4]); v9 = conv(x2, ws[5], bs[5])
    v10 = v6 + v7 + v8 - v9
    v15 = bn(v10, gs[2], bts[2]) - bn(v10, gs[3], bts[3]) \
        + bn(v10, gs[4], bts[4]) + bn(v10, gs[5], bts[5])
    return v5 / v15


if __name__ == "__main__":
    key = jax.random.PRNGKey(0)
    k_x1, k_x2, k_w, k_b, k_g, k_be = jax.random.split(key, 6)

    # Inputs as in the original script: (1, 3, 32, 32)
    x1 = jax.random.normal(k_x1, (1, 3, 32, 32), jnp.float32)
    x2 = jax.random.normal(k_x2, (1, 3, 32, 32), jnp.float32)

    # Conv2d(3, 8, 1) weights in PyTorch OI layout (8, 3); BN params (8,).
    # BN gammas kept small / betas offset so the divisor stays away from zero.
    ws = [0.2 * jax.random.normal(jax.random.fold_in(k_w, i), (C_OUT, C_IN),
                                  jnp.float32) for i in range(N_CONV)]
    bs = [0.1 * jax.random.normal(jax.random.fold_in(k_b, i), (C_OUT,),
                                  jnp.float32) for i in range(N_CONV)]
    gs = [0.1 + 0.02 * jax.random.normal(jax.random.fold_in(k_g, i), (C_OUT,),
                                         jnp.float32) for i in range(N_CONV)]
    bts = [0.5 + 0.05 * jax.random.normal(jax.random.fold_in(k_be, i), (C_OUT,),
                                          jnp.float32) for i in range(N_CONV)]

    # ---- host-side, one-time parameter packing (single (48,16) slab) ----
    # conv1 reads x1 channels (cols 0:3); conv2 reads x2 channels (cols 8:11);
    # conv3..6 fold into one block: cols 0:3 = w3+w4, cols 8:11 = w5-w6.
    # Conv biases are omitted entirely (BatchNorm cancels them exactly).
    p_np = np.zeros((2 * M, 2 * C_PAD), np.float32)
    p_np[0:C_OUT, 0:C_IN] = np.asarray(ws[0])
    p_np[C_OUT:2 * C_OUT, C_PAD:C_PAD + C_IN] = np.asarray(ws[1])
    p_np[2 * C_OUT:3 * C_OUT, 0:C_IN] = np.asarray(ws[2] + ws[3])
    p_np[2 * C_OUT:3 * C_OUT, C_PAD:C_PAD + C_IN] = np.asarray(ws[4] - ws[5])
    # bn3..bn6 normalize the same tensor -> single combined affine.
    g_all = np.concatenate([np.asarray(gs[0]), np.asarray(gs[1]),
                            np.asarray(gs[2] - gs[3] + gs[4] + gs[5])])
    be_all = np.concatenate([np.asarray(bts[0]), np.asarray(bts[1]),
                             np.asarray(bts[2] - bts[3] + bts[4] + bts[5])])
    p_np[M:2 * M, 0] = g_all
    p_np[M:2 * M, 1] = be_all
    params = jnp.asarray(p_np)

    out = jax.block_until_ready(model_forward(x1, x2, params))

    ref = jax.block_until_ready(reference(x1, x2, ws, bs, gs, bts))
    assert out.shape == (1, 8, 17, 17), out.shape
    np.testing.assert_allclose(np.asarray(out), np.asarray(ref),
                               rtol=1e-3, atol=1e-3)
    print("KERNEL_OK")
</pallas_src>

<mosaic_0001>
module attributes {stable_mosaic.version = 11 : i64} {
  func.func @model_kernel(%arg0: memref<16x289xf32, #tpu.memory_space<vmem>>, %arg1: memref<48x16xf32, #tpu.memory_space<vmem>>, %arg2: memref<8x289xf32, #tpu.memory_space<vmem>>) attributes {dimension_semantics = [], scalar_prefetch = 0 : i64, scratch_operands = 0 : i64, tpu.core_type = #tpu.core_type<tc>} {
    %c0 = arith.constant 0 : index
    %c0_0 = arith.constant 0 : index
    %0 = vector.load %arg0[%c0, %c0_0] : memref<16x289xf32, #tpu.memory_space<vmem>>, vector<16x289xf32>
    %c0_1 = arith.constant 0 : index
    %c0_2 = arith.constant 0 : index
    %1 = vector.load %arg1[%c0_1, %c0_2] : memref<48x16xf32, #tpu.memory_space<vmem>>, vector<24x16xf32>
    %c24 = arith.constant 24 : index
    %c0_3 = arith.constant 0 : index
    %2 = vector.load %arg1[%c24, %c0_3] : memref<48x16xf32, #tpu.memory_space<vmem>>, vector<24x1xf32>
    %c24_4 = arith.constant 24 : index
    %c1 = arith.constant 1 : index
    %3 = vector.load %arg1[%c24_4, %c1] : memref<48x16xf32, #tpu.memory_space<vmem>>, vector<24x1xf32>
    %cst = arith.constant dense<0.000000e+00> : vector<24x289xf32>
    %4 = tpu.matmul %1, %0, %cst {dimension_numbers = #tpu.dot_dimension_numbers<[1], [0], [0], [1], [0, 0, 1, 1], [], []>} : vector<24x16xf32>, vector<16x289xf32>, vector<24x289xf32> -> vector<24x289xf32>
    %cst_5 = arith.constant dense<0.000000e+00> : vector<24xf32>
    %5 = vector.multi_reduction <add>, %4, %cst_5 [1] : vector<24x289xf32> to vector<24xf32>
    %6 = vector.shape_cast %5 : vector<24xf32> to vector<24x1xf32>
    %7 = arith.mulf %4, %4 : vector<24x289xf32>
    %cst_6 = arith.constant dense<0.000000e+00> : vector<24xf32>
    %8 = vector.multi_reduction <add>, %7, %cst_6 [1] : vector<24x289xf32> to vector<24xf32>
    %9 = vector.shape_cast %8 : vector<24xf32> to vector<24x1xf32>
    %cst_7 = arith.constant 0.00346020772 : f32
    %10 = vector.broadcast %cst_7 : f32 to vector<24x1xf32>
    %11 = arith.mulf %6, %10 : vector<24x1xf32>
    %cst_8 = arith.constant 0.00346020772 : f32
    %12 = vector.broadcast %cst_8 : f32 to vector<24x1xf32>
    %13 = arith.mulf %9, %12 : vector<24x1xf32>
    %14 = arith.mulf %11, %11 : vector<24x1xf32>
    %15 = arith.subf %13, %14 : vector<24x1xf32>
    %cst_9 = arith.constant 9.99999974E-6 : f32
    %16 = vector.broadcast %cst_9 : f32 to vector<24x1xf32>
    %17 = arith.addf %15, %16 : vector<24x1xf32>
    %18 = math.rsqrt %17 : vector<24x1xf32>
    %19 = arith.mulf %18, %2 : vector<24x1xf32>
    %20 = vector.broadcast %11 : vector<24x1xf32> to vector<24x289xf32>
    %21 = arith.subf %4, %20 : vector<24x289xf32>
    %22 = vector.broadcast %19 : vector<24x1xf32> to vector<24x289xf32>
    %23 = arith.mulf %21, %22 : vector<24x289xf32>
    %24 = vector.broadcast %3 : vector<24x1xf32> to vector<24x289xf32>
    %25 = arith.addf %23, %24 : vector<24x289xf32>
    %26 = vector.extract_strided_slice %25 {offsets = [0, 0], sizes = [8, 289], strides = [1, 1]} : vector<24x289xf32> to vector<8x289xf32>
    %27 = vector.extract_strided_slice %25 {offsets = [8, 0], sizes = [8, 289], strides = [1, 1]} : vector<24x289xf32> to vector<8x289xf32>
    %28 = arith.addf %26, %27 : vector<8x289xf32>
    %29 = vector.extract_strided_slice %25 {offsets = [16, 0], sizes = [8, 289], strides = [1, 1]} : vector<24x289xf32> to vector<8x289xf32>
    %30 = tpu.reciprocal %29 : vector<8x289xf32> -> vector<8x289xf32>
    %31 = arith.mulf %28, %30 : vector<8x289xf32>
    %c0_10 = arith.constant 0 : index
    %c0_11 = arith.constant 0 : index
    %32 = vector.load %arg2[%c0_10, %c0_11] : memref<8x289xf32, #tpu.memory_space<vmem>>, vector<8x289xf32>
    tpu.vector_store %arg2[%c0_10, %c0_11], %31 {strides = array<i32>} : memref<8x289xf32, #tpu.memory_space<vmem>>, vector<8x289xf32>,
    return
  }
}

</mosaic_0001>

<llo_original>
// kernel: model_forward.1
$region0: #{model_forward.1}
  #allocation0 [shape = 'u32[]', space=smem, size = 0x4, offset = 0x4, fixed_abs, tag = 'smem constant byte address 0x4 - core index']
  #allocation1 [shape = 'u32[144,128]{1,0:T(1,128)}', space=vmem, size = 0x12000, scoped, tag = 'internal scratch']
  %s0 = inlined_call_operand.vmem [shape: f32[16,289], index: 0, kind: input, shape index: {}]
  %s1 = inlined_call_operand.vmem [shape: f32[48,16], index: 1, kind: input, shape index: {}]
  %s2 = inlined_call_operand.vmem [shape: f32[8,289], index: 2, kind: output, shape index: {}]
  %s3 = sld [smem:[#allocation0]]
  $region18: #{model_forward.1} parent=0
    _
  %s5 = ssub.s32 1, %s3
  %s6 = scalar_select 0, %s5, %s3
  // Predicated region
  $region2: #{model_forward.1} parent=0 // pred_check
    _
  $region3: #{model_forward.1} parent=0 // pred_check_branch
    %8 = sbr.rel (0) target = $region5
  $region4: #{model_forward.1} parent=0 // pred_region
    _
  $region5: #{model_forward.1} parent=0 // pred_fallthru
    _
  // Predicated region
  $region6: #{model_forward.1} parent=0 // pred_check
    _
  $region7: #{model_forward.1} parent=0 // pred_check_branch
    %10 = sbr.rel (0) target = $region9
  $region8: #{model_forward.1} parent=0 // pred_region
    _
  $region9: #{model_forward.1} parent=0 // pred_fallthru
    _
  %v11 = vld [vmem:[%s0] sm:$0xff]
  %v12 = vld [vmem:[%s0 + $0x8] sm:$0xff]
  %v13 = vld [vmem:[%s0 + $0x10] sm:$0xff]
  %v14 = vld [vmem:[%s0 + $0x18] sm:$0xff]
  %v15 = vld [vmem:[%s0 + $0x20] sm:$0xff]
  %v16 = vld [vmem:[%s0 + $0x28] sm:$0xff]
  %v17 = vld [vmem:[%s1] sm:$0xff]
  %v18 = vld [vmem:[%s1 + $0x8] sm:$0xff]
  %v19 = vld [vmem:[%s1 + $0x10] sm:$0xff]
  %v20 = vld [vmem:[%s1 + $0x18] sm:$0xff]
  %v21 = vld [vmem:[%s1 + $0x20] sm:$0xff]
  %v22 = vld [vmem:[%s1 + $0x28] sm:$0xff]
  %vm23 = vcmask 130048
  %v25 = vsel %vm23, %v17, 0
  %v28 = vsel %vm23, %v18, 0
  %v31 = vsel %vm23, %v19, 0
  %33 = vmatprep.subr.mxu0 %v12
  %34 = vmatpush1.msra.mxu0 %v11
  %35 = vmatprep.subr.mxu0 %v15
  %36 = vmatpush1.msra.mxu0 %v14
  %37 = vmatprep.subr.mxu0 0.0
  %38 = vmatpush1.msra.mxu0 0.0
  %39 = vmatprep.subr.mxu0 0.0
  %40 = vmatpush1.msra.mxu0 0.0
  %41 = vmatprep.subr.mxu0 0.0
  %42 = vmatpush1.msra.mxu0 0.0
  %43 = vmatprep.subr.mxu0 0.0
  %44 = vmatpush1.msra.mxu0 0.0
  %45 = vmatprep.subr.mxu0 0.0
  %46 = vmatpush1.msra.mxu0 0.0
  %47 = vmatprep.subr.mxu0 0.0
  %48 = vmatpush1.msra.mxu0 0.0
  %49 = vmatprep.subr.mxu0 0.0
  %50 = vmatpush1.msra.mxu0 0.0
  %51 = vmatprep.subr.mxu0 0.0
  %52 = vmatpush1.msra.mxu0 0.0
  %53 = vmatprep.subr.mxu0 0.0
  %54 = vmatpush1.msra.mxu0 0.0
  %55 = vmatprep.subr.mxu0 0.0
  %56 = vmatpush1.msra.mxu0 0.0
  %57 = vmatprep.subr.mxu0 0.0
  %58 = vmatpush1.msra.mxu0 0.0
  %59 = vmatprep.subr.mxu0 0.0
  %60 = vmatpush1.msra.mxu0 0.0
  %61 = vmatprep.subr.mxu0 0.0
  %62 = vmatpush1.msra.mxu0 0.0
  %63 = vmatprep.subr.mxu0 0.0
  %64 = vmatpush1.msra.mxu0 0.0
  %65 = vmatprep.subr.mxu0 0.0
  %66 = vmatpush1.msra.mxu0 0.0
  %67 = vmatprep.subr.mxu0 0.0
  %68 = vmatpush1.msra.mxu0 0.0
  %69 = vmatprep.subr.mxu0 0.0
  %70 = vmatpush1.msra.mxu0 0.0
  %71 = vmatprep.subr.mxu0 0.0
  %72 = vmatpush1.msra.mxu0 0.0
  %73 = vmatprep.subr.mxu0 0.0
  %74 = vmatpush1.msra.mxu0 0.0
  %75 = vmatprep.subr.mxu0 0.0
  %76 = vmatpush1.msra.mxu0 0.0
  %77 = vmatprep.subr.mxu0 0.0
  %78 = vmatpush1.msra.mxu0 0.0
  %79 = vmatprep.subr.mxu0 0.0
  %80 = vmatpush1.msra.mxu0 0.0
  %81 = vmatprep.subr.mxu0 0.0
  %82 = vmatpush1.msra.mxu0 0.0
  %83 = vmatprep.subr.mxu0 0.0
  %84 = vmatpush1.msra.mxu0 0.0
  %85 = vmatprep.subr.mxu0 0.0
  %86 = vmatpush1.msra.mxu0 0.0
  %87 = vmatprep.subr.mxu0 0.0
  %88 = vmatpush1.msra.mxu0 0.0
  %89 = vmatprep.subr.mxu0 0.0
  %90 = vmatpush1.msra.mxu0 0.0
  %91 = vmatprep.subr.mxu0 0.0
  %92 = vmatpush1.msra.mxu0 0.0
  %93 = vmatprep.subr.mxu0 0.0
  %94 = vmatpush1.msra.mxu0 0.0
  %95 = vmatprep.subr.mxu0 0.0
  %96 = vmatpush1.msra.mxu0 0.0
  %97 = vmatprep.mubr.f32.mxu0 0.0
  %98 = vmatmul.mubr.f32.gmra.mrb[0].mxu0 %v25
  %v99 = vpop.f32.mrb[0].mxu0
  %v100 = vadd.f32 0.0, %v99
  %v101 = vpop.f32.mrb[0].mxu0
  %v102 = vadd.f32 0.0, %v101
  %103 = vmatprep.mubr.f32.mxu0 0.0
  %104 = vmatmul.mubr.f32.gmra.mrb[0].mxu0 %v28
  %v105 = vpop.f32.mrb[0].mxu0
  %v106 = vadd.f32 0.0, %v105
  %v107 = vpop.f32.mrb[0].mxu0
  %v108 = vadd.f32 0.0, %v107
  %109 = vmatprep.mubr.f32.mxu0 0.0
  %110 = vmatmul.mubr.f32.gmra.mrb[0].mxu0 %v31
  %v111 = vpop.f32.mrb[0].mxu0
  %v112 = vadd.f32 0.0, %v111
  %v113 = vpop.f32.mrb[0].mxu0
  %v114 = vadd.f32 0.0, %v113
  %115 = vdwg.mxu0
  %116 = vmatprep.subr.mxu0 0.0
  %117 = vmatpush1.msra.mxu0 %v13
  %118 = vmatprep.subr.mxu0 0.0
  %119 = vmatpush1.msra.mxu0 %v16
  %120 = vmatprep.subr.mxu0 0.0
  %121 = vmatpush1.msra.mxu0 0.0
  %122 = vmatprep.subr.mxu0 0.0
  %123 = vmatpush1.msra.mxu0 0.0
  %124 = vmatprep.subr.mxu0 0.0
  %125 = vmatpush1.msra.mxu0 0.0
  %126 = vmatprep.subr.mxu0 0.0
  %127 = vmatpush1.msra.mxu0 0.0
  %128 = vmatprep.subr.mxu0 0.0
  %129 = vmatpush1.msra.mxu0 0.0
  %130 = vmatprep.subr.mxu0 0.0
  %131 = vmatpush1.msra.mxu0 0.0
  %132 = vmatprep.subr.mxu0 0.0
  %133 = vmatpush1.msra.mxu0 0.0
  %134 = vmatprep.subr.mxu0 0.0
  %135 = vmatpush1.msra.mxu0 0.0
  %136 = vmatprep.subr.mxu0 0.0
  %137 = vmatpush1.msra.mxu0 0.0
  %138 = vmatprep.subr.mxu0 0.0
  %139 = vmatpush1.msra.mxu0 0.0
  %140 = vmatprep.subr.mxu0 0.0
  %141 = vmatpush1.msra.mxu0 0.0
  %142 = vmatprep.subr.mxu0 0.0
  %143 = vmatpush1.msra.mxu0 0.0
  %144 = vmatprep.subr.mxu0 0.0
  %145 = vmatpush1.msra.mxu0 0.0
  %146 = vmatprep.subr.mxu0 0.0
  %147 = vmatpush1.msra.mxu0 0.0
  %148 = vmatprep.subr.mxu0 0.0
  %149 = vmatpush1.msra.mxu0 0.0
  %150 = vmatprep.subr.mxu0 0.0
  %151 = vmatpush1.msra.mxu0 0.0
  %152 = vmatprep.subr.mxu0 0.0
  %153 = vmatpush1.msra.mxu0 0.0
  %154 = vmatprep.subr.mxu0 0.0
  %155 = vmatpush1.msra.mxu0 0.0
  %156 = vmatprep.subr.mxu0 0.0
  %157 = vmatpush1.msra.mxu0 0.0
  %158 = vmatprep.subr.mxu0 0.0
  %159 = vmatpush1.msra.mxu0 0.0
  %160 = vmatprep.subr.mxu0 0.0
  %161 = vmatpush1.msra.mxu0 0.0
  %162 = vmatprep.subr.mxu0 0.0
  %163 = vmatpush1.msra.mxu0 0.0
  %164 = vmatprep.subr.mxu0 0.0
  %165 = vmatpush1.msra.mxu0 0.0
  %166 = vmatprep.subr.mxu0 0.0
  %167 = vmatpush1.msra.mxu0 0.0
  %168 = vmatprep.subr.mxu0 0.0
  %169 = vmatpush1.msra.mxu0 0.0
  %170 = vmatprep.subr.mxu0 0.0
  %171 = vmatpush1.msra.mxu0 0.0
  %172 = vmatprep.subr.mxu0 0.0
  %173 = vmatpush1.msra.mxu0 0.0
  %174 = vmatprep.subr.mxu0 0.0
  %175 = vmatpush1.msra.mxu0 0.0
  %176 = vmatprep.subr.mxu0 0.0
  %177 = vmatpush1.msra.mxu0 0.0
  %178 = vmatprep.subr.mxu0 0.0
  %179 = vmatpush1.msra.mxu0 0.0
  %180 = vmatprep.mubr.f32.mxu0 0.0
  %181 = vmatmul.mubr.f32.gmra.mrb[0].mxu0 %v25
  %v182 = vpop.f32.mrb[0].mxu0
  %v183 = vadd.f32 0.0, %v182
  %v184 = vpop.f32.mrb[0].mxu0
  %185 = vmatprep.mubr.f32.mxu0 0.0
  %186 = vmatmul.mubr.f32.gmra.mrb[0].mxu0 %v28
  %v187 = vpop.f32.mrb[0].mxu0
  %v188 = vadd.f32 0.0, %v187
  %v189 = vpop.f32.mrb[0].mxu0
  %190 = vmatprep.mubr.f32.mxu0 0.0
  %191 = vmatmul.mubr.f32.gmra.mrb[0].mxu0 %v31
  %v192 = vpop.f32.mrb[0].mxu0
  %v193 = vadd.f32 0.0, %v192
  %v194 = vpop.f32.mrb[0].mxu0
  %195 = vdwg.mxu0
  %v196 = vadd.f32 %v100, %v102
  %vm197 = vcmask 269312
  %v198 = vsel %vm197, %v183, 0.0
  %v199 = vadd.f32 %v196, %v198
  %200 = vadd.xlane.f32.xlu0 %v199
  %v201 = vpop.xlane.xlu0 %200
  %v202 = vadd.f32 %v106, %v108
  %v203 = vsel %vm197, %v188, 0.0
  %v204 = vadd.f32 %v202, %v203
  %205 = vadd.xlane.f32.xlu0 %v204
  %v206 = vpop.xlane.xlu0 %205
  %v207 = vadd.f32 %v112, %v114
  %v208 = vsel %vm197, %v193, 0.0
  %v209 = vadd.f32 %v207, %v208
  %210 = vadd.xlane.f32.xlu0 %v209
  %v211 = vpop.xlane.xlu0 %210
  %v212 = vmul.f32 %v100, %v100
  %v213 = vmul.f32 %v102, %v102
  %v214 = vmul.f32 %v183, %v183
  %v215 = vmul.f32 %v106, %v106
  %v216 = vmul.f32 %v108, %v108
  %v217 = vmul.f32 %v188, %v188
  %v218 = vmul.f32 %v112, %v112
  %v219 = vmul.f32 %v114, %v114
  %v220 = vmul.f32 %v193, %v193
  %v221 = vadd.f32 %v212, %v213
  %v222 = vsel %vm197, %v214, 0.0
  %v223 = vadd.f32 %v221, %v222
  %224 = vadd.xlane.f32.xlu0 %v223
  %v225 = vpop.xlane.xlu0 %224
  %v226 = vadd.f32 %v215, %v216
  %v227 = vsel %vm197, %v217, 0.0
  %v228 = vadd.f32 %v226, %v227
  %229 = vadd.xlane.f32.xlu0 %v228
  %v230 = vpop.xlane.xlu0 %229
  %v231 = vadd.f32 %v218, %v219
  %v232 = vsel %vm197, %v220, 0.0
  %v233 = vadd.f32 %v231, %v232
  %234 = vadd.xlane.f32.xlu0 %v233
  %v235 = vpop.xlane.xlu0 %234
  %v236 = vmul.f32 %v201, 0.0034602077
  %v237 = vmul.f32 %v206, 0.0034602077
  %v238 = vmul.f32 %v211, 0.0034602077
  %v239 = vmul.f32 %v225, 0.0034602077
  %v240 = vmul.f32 %v230, 0.0034602077
  %v241 = vmul.f32 %v235, 0.0034602077
  %v242 = vmul.f32 %v236, %v236
  %v243 = vmul.f32 %v237, %v237
  %v244 = vmul.f32 %v238, %v238
  %v245 = vsub.f32 %v239, %v242
  %v246 = vsub.f32 %v240, %v243
  %v247 = vsub.f32 %v241, %v244
  %v248 = vadd.f32 %v245, 1e-05
  %v249 = vadd.f32 %v246, 1e-05
  %v250 = vadd.f32 %v247, 1e-05
  %v251 = vrsqrt.pop %v248
  %v252 = vrsqrt.pop %v249
  %v253 = vrsqrt.pop %v250
  %v254 = vmul.f32 %v251, %v20
  %v255 = vmul.f32 %v252, %v21
  %v256 = vmul.f32 %v253, %v22
  %v257 = vsub.f32 %v100, %v236
  %v258 = vsub.f32 %v102, %v236
  %v259 = vsub.f32 %v183, %v236
  %v260 = vsub.f32 %v106, %v237
  %v261 = vsub.f32 %v108, %v237
  %v262 = vsub.f32 %v188, %v237
  %v263 = vsub.f32 %v112, %v238
  %v264 = vsub.f32 %v114, %v238
  %v265 = vsub.f32 %v193, %v238
  %267 = vset.pattern.permute.xlu0 0
  %268 = vperm.xlu0 %267, %v254
  %v269 = vpop.permute.xlu0 %268
  %272 = vset.pattern.permute.xlu0 0
  %273 = vperm.xlu0 %272, %v255
  %v274 = vpop.permute.xlu0 %273
  %277 = vset.pattern.permute.xlu0 0
  %278 = vperm.xlu0 %277, %v256
  %v279 = vpop.permute.xlu0 %278
  %v281 = vmul.f32 %v257, %v269
  %v282 = vmul.f32 %v258, %v269
  %v283 = vmul.f32 %v259, %v269
  %v284 = vmul.f32 %v260, %v274
  %v285 = vmul.f32 %v261, %v274
  %v286 = vmul.f32 %v262, %v274
  %v287 = vmul.f32 %v263, %v279
  %v288 = vmul.f32 %v264, %v279
  %v289 = vmul.f32 %v265, %v279
  %291 = vset.pattern.permute.xlu0 1
  %292 = vperm.xlu0 %291, %v20
  %v293 = vpop.permute.xlu0 %292
  %296 = vset.pattern.permute.xlu0 1
  %297 = vperm.xlu0 %296, %v21
  %v298 = vpop.permute.xlu0 %297
  %301 = vset.pattern.permute.xlu0 1
  %302 = vperm.xlu0 %301, %v22
  %v303 = vpop.permute.xlu0 %302
  %v305 = vadd.f32 %v281, %v293
  %v306 = vadd.f32 %v282, %v293
  %v307 = vadd.f32 %v283, %v293
  %v308 = vadd.f32 %v284, %v298
  %v309 = vadd.f32 %v285, %v298
  %v310 = vadd.f32 %v286, %v298
  %v311 = vadd.f32 %v287, %v303
  %v312 = vadd.f32 %v288, %v303
  %v313 = vadd.f32 %v289, %v303
  %v314 = vadd.f32 %v305, %v308
  %v315 = vadd.f32 %v306, %v309
  %v316 = vadd.f32 %v307, %v310
  %v317 = vrcp.pop %v311
  %v318 = vrcp.pop %v312
  %v319 = vrcp.pop %v313
  %v320 = vmul.f32 %v314, %v317
  %v321 = vmul.f32 %v315, %v318
  %v322 = vmul.f32 %v316, %v319
  %323 = vst [vmem:[%s2] sm:$0xff] %v320
  %324 = vst [vmem:[%s2 + $0x8] sm:$0xff] %v321
  %325 = vst.msk [vmem:[%s2 + $0x10] sm:$0xff] %vm197, %v322
  // Predicated region
  $region10: #{model_forward.1} parent=0 // pred_check
    _
  $region11: #{model_forward.1} parent=0 // pred_check_branch
    %327 = sbr.rel (0) target = $region13
  $region12: #{model_forward.1} parent=0 // pred_region
    _
  $region13: #{model_forward.1} parent=0 // pred_fallthru
    _
  // Predicated region
  $region14: #{model_forward.1} parent=0 // pred_check
    _
  $region15: #{model_forward.1} parent=0 // pred_check_branch
    %329 = sbr.rel (0) target = $region17
  $region16: #{model_forward.1} parent=0 // pred_region
    _
  $region17: #{model_forward.1} parent=0 // pred_fallthru
    _

</llo_original>
